<compile_context>
chip_gen: v6e
topology: v6e:2x2x1
jax: 0.10.0
libtpu: 0.0.40
codegen_flags: <defaults>
</compile_context>

<pallas_src>
import jax
import jax.numpy as jnp
import numpy as np
from jax.experimental import pallas as pl
from jax.experimental.pallas import tpu as pltpu

_LANE = 128


def _round_up(n, m):
    return ((n + m - 1) // m) * m


# ---------------------------------------------------------------------------
# Fused MLP kernel
# ---------------------------------------------------------------------------

def _make_mlp_kernel(hidden_dims, hpads, out_pad, eps=1e-5, neg_slope=0.01):
    """x -> [Linear -> LeakyReLU -> LayerNorm] * L -> Linear (all lane-padded)."""
    num_hidden = len(hidden_dims)

    def kernel(x_ref, *refs):
        out_ref = refs[-1]
        aux_ref = refs[-2]          # stacked (3*L+1, maxw): b,g,beta per layer + b_out
        w_refs = refs[:-2]          # L hidden weights + 1 output weight (zero-padded)

        h = x_ref[...].astype(jnp.float32)
        for l in range(num_hidden):
            hp = hpads[l]
            w = w_refs[l][...]
            b = aux_ref[pl.ds(3 * l + 0, 1), pl.ds(0, hp)]
            g = aux_ref[pl.ds(3 * l + 1, 1), pl.ds(0, hp)]
            beta = aux_ref[pl.ds(3 * l + 2, 1), pl.ds(0, hp)]

            # Linear (lane-padded to 128) + LeakyReLU.  Padded lanes stay exactly 0.
            h = jnp.dot(h, w, preferred_element_type=jnp.float32) + b
            h = jnp.where(h >= 0, h, neg_slope * h)

            # LayerNorm over the REAL width: padded lanes are zero, so full-lane
            # sums already equal sums over the real lanes; var via E[h^2]-mu^2
            # avoids needing a mask for the (0 - mu)^2 terms.
            inv_n = 1.0 / float(hidden_dims[l])
            mu = jnp.sum(h, axis=-1, keepdims=True) * inv_n
            ex2 = jnp.sum(h * h, axis=-1, keepdims=True) * inv_n
            var = ex2 - mu * mu
            h = (h - mu) * jax.lax.rsqrt(var + eps) * g + beta  # padded lanes -> 0

        w_o = w_refs[num_hidden][...]
        b_o = aux_ref[pl.ds(3 * num_hidden, 1), pl.ds(0, out_pad)]
        y = jnp.dot(h, w_o, preferred_element_type=jnp.float32) + b_o
        out_ref[...] = y.astype(out_ref.dtype)   # lane-dense (bm, out_pad) store

    return kernel


# ---------------------------------------------------------------------------
# Wrapper
# ---------------------------------------------------------------------------

def mlp_forward(params, x, *, max_bm=512, vmem_limit_bytes=32 * 1024 * 1024):
    """Fused forward pass. x: (B, in_dim) float32 -> (B, out_dim) float32."""
    b, in_dim = x.shape
    hidden_dims = [layer["w"].shape[1] for layer in params["hidden"]]
    out_dim = params["w_out"].shape[1]

    hpads = [_round_up(h, _LANE) for h in hidden_dims]
    out_pad = _round_up(out_dim, _LANE)
    maxw = max(hpads + [out_pad])

    # ---- batch tiling: pad ragged batches to a tile multiple (no giant fallback)
    bm = min(max_bm, _round_up(b, 8))
    b_pad = _round_up(b, bm)
    x_p = jnp.pad(x, ((0, b_pad - b), (0, 0))) if b_pad != b else x

    # ---- zero-pad weights so every matmul output / activation is 128-lane dense
    ws = []
    prev_w = in_dim                       # feature width of h entering layer l
    for layer, hp in zip(params["hidden"], hpads):
        w = layer["w"]
        k, n = w.shape
        ws.append(jnp.pad(w, ((0, prev_w - k), (0, hp - n))))
        prev_w = hp
    w_o = params["w_out"]
    ws.append(jnp.pad(w_o, ((0, prev_w - w_o.shape[0]), (0, out_pad - out_dim))))

    # ---- pack all small per-layer params + output bias into one stacked array
    def _row(v, width):
        return jnp.pad(v.astype(jnp.float32), (0, width - v.shape[0]))

    aux_rows = []
    for layer in params["hidden"]:
        aux_rows += [_row(layer["b"], maxw), _row(layer["g"], maxw),
                     _row(layer["beta"], maxw)]
    aux_rows.append(_row(params["b_out"], maxw))
    aux = jnp.stack(aux_rows)             # (3*L + 1, maxw)

    in_specs = [pl.BlockSpec((bm, in_dim), lambda i: (i, 0))]
    for w in ws:
        in_specs.append(pl.BlockSpec(w.shape, lambda i: (0, 0)))
    in_specs.append(pl.BlockSpec(aux.shape, lambda i: (0, 0)))

    y = pl.pallas_call(
        _make_mlp_kernel(tuple(hidden_dims), tuple(hpads), out_pad),
        out_shape=jax.ShapeDtypeStruct((b_pad, out_pad), jnp.float32),
        grid=(b_pad // bm,),
        in_specs=in_specs,
        out_specs=pl.BlockSpec((bm, out_pad), lambda i: (i, 0)),
        compiler_params=pltpu.CompilerParams(
            # independent batch tiles -> shard across both v7x TensorCores
            dimension_semantics=("parallel",),
            vmem_limit_bytes=vmem_limit_bytes),
    )(x_p, *ws, aux)

    return y[:b, :out_dim]


# ---------------------------------------------------------------------------
# Parameters (PyTorch-style init) and pure-JAX reference
# ---------------------------------------------------------------------------

def init_params(key, in_dim=784, hidden=(32, 32), out_dim=10):
    params = {"hidden": []}
    keys = jax.random.split(key, 2 * (len(hidden) + 1))

    def u(k, shape, fan_in):
        bound = 1.0 / np.sqrt(fan_in)
        return jax.random.uniform(k, shape, jnp.float32, -bound, bound)

    h_old, ki = in_dim, 0
    for h in hidden:
        params["hidden"].append(dict(
            w=u(keys[ki], (h_old, h), h_old),        # stored as (in, out)
            b=u(keys[ki + 1], (h,), h_old),
            g=jnp.ones((h,), jnp.float32),           # LayerNorm gamma
            beta=jnp.zeros((h,), jnp.float32),       # LayerNorm beta
        ))
        ki += 2
        h_old = h
    params["w_out"] = u(keys[ki], (h_old, out_dim), h_old)
    params["b_out"] = u(keys[ki + 1], (out_dim,), h_old)
    return params


def reference_mlp(params, x):
    eps, neg_slope = 1e-5, 0.01
    h = x
    for layer in params["hidden"]:
        h = jnp.dot(h, layer["w"], precision=jax.lax.Precision.HIGHEST) + layer["b"]
        h = jnp.where(h >= 0, h, neg_slope * h)
        mu = h.mean(axis=-1, keepdims=True)
        var = ((h - mu) ** 2).mean(axis=-1, keepdims=True)
        h = (h - mu) / jnp.sqrt(var + eps) * layer["g"] + layer["beta"]
    return jnp.dot(h, params["w_out"], precision=jax.lax.Precision.HIGHEST) + params["b_out"]


# ---------------------------------------------------------------------------

if __name__ == "__main__":
    key = jax.random.PRNGKey(0)
    kx, kp = jax.random.split(key)

    batch, in_dim, hidden, out_dim = 2, 784, (32, 32), 10   # module defaults
    x = jax.random.normal(kx, (batch, in_dim), jnp.float32)
    params = init_params(kp, in_dim, hidden, out_dim)

    fwd = jax.jit(mlp_forward)
    y = jax.block_until_ready(fwd(params, x))

    ref = reference_mlp(params, x)
    np.testing.assert_allclose(np.asarray(y), np.asarray(ref), atol=2e-3, rtol=2e-3)
    assert y.shape == (batch, out_dim)

    print("KERNEL_OK")
</pallas_src>

<mosaic_0001>
module attributes {stable_mosaic.version = 11 : i64} {
  func.func @kernel(%arg0: i32, %arg1: memref<8x784xf32, #tpu.memory_space<vmem>>, %arg2: memref<784x128xf32, #tpu.memory_space<vmem>>, %arg3: memref<128x128xf32, #tpu.memory_space<vmem>>, %arg4: memref<128x128xf32, #tpu.memory_space<vmem>>, %arg5: memref<7x128xf32, #tpu.memory_space<vmem>>, %arg6: memref<8x128xf32, #tpu.memory_space<vmem>>) attributes {dimension_semantics = [#tpu.dimension_semantics<parallel>], iteration_bounds = array<i64: 1>, scalar_prefetch = 0 : i64, scratch_operands = 0 : i64, tpu.core_type = #tpu.core_type<tc>, window_params = [{transform_indices = @transform_0, window_bounds = array<i64: 8, 784>}, {pipeline_mode = #tpu.pipeline_mode<synchronous>, transform_indices = @transform_1, window_bounds = array<i64: 784, 128>}, {pipeline_mode = #tpu.pipeline_mode<synchronous>, transform_indices = @transform_2, window_bounds = array<i64: 128, 128>}, {pipeline_mode = #tpu.pipeline_mode<synchronous>, transform_indices = @transform_3, window_bounds = array<i64: 128, 128>}, {pipeline_mode = #tpu.pipeline_mode<synchronous>, transform_indices = @transform_4, window_bounds = array<i64: 7, 128>}, {transform_indices = @transform_5, window_bounds = array<i64: 8, 128>}]} {
    %c0 = arith.constant 0 : index
    %c0_0 = arith.constant 0 : index
    %0 = vector.load %arg1[%c0, %c0_0] : memref<8x784xf32, #tpu.memory_space<vmem>>, vector<8x784xf32>
    %c0_1 = arith.constant 0 : index
    %c0_2 = arith.constant 0 : index
    %1 = vector.load %arg2[%c0_1, %c0_2] : memref<784x128xf32, #tpu.memory_space<vmem>>, vector<784x128xf32>
    %c0_3 = arith.constant 0 : index
    %c0_4 = arith.constant 0 : index
    %2 = vector.load %arg5[%c0_3, %c0_4] : memref<7x128xf32, #tpu.memory_space<vmem>>, vector<1x128xf32>
    %c1 = arith.constant 1 : index
    %c0_5 = arith.constant 0 : index
    %3 = vector.load %arg5[%c1, %c0_5] : memref<7x128xf32, #tpu.memory_space<vmem>>, vector<1x128xf32>
    %c2 = arith.constant 2 : index
    %c0_6 = arith.constant 0 : index
    %4 = vector.load %arg5[%c2, %c0_6] : memref<7x128xf32, #tpu.memory_space<vmem>>, vector<1x128xf32>
    %cst = arith.constant dense<0.000000e+00> : vector<8x128xf32>
    %5 = tpu.matmul %0, %1, %cst {dimension_numbers = #tpu.dot_dimension_numbers<[1], [0], [0], [1], [0, 0, 1, 1], [], []>} : vector<8x784xf32>, vector<784x128xf32>, vector<8x128xf32> -> vector<8x128xf32>
    %6 = vector.broadcast %2 : vector<1x128xf32> to vector<8x128xf32>
    %7 = arith.addf %5, %6 : vector<8x128xf32>
    %cst_7 = arith.constant 0.000000e+00 : f32
    %8 = vector.broadcast %cst_7 : f32 to vector<8x128xf32>
    %9 = arith.cmpf oge, %7, %8 : vector<8x128xf32>
    %cst_8 = arith.constant 0.00999999977 : f32
    %10 = vector.broadcast %cst_8 : f32 to vector<8x128xf32>
    %11 = arith.mulf %10, %7 : vector<8x128xf32>
    %12 = arith.select %9, %7, %11 : vector<8x128xi1>, vector<8x128xf32>
    %cst_9 = arith.constant dense<0.000000e+00> : vector<8xf32>
    %13 = vector.multi_reduction <add>, %12, %cst_9 [1] : vector<8x128xf32> to vector<8xf32>
    %14 = vector.shape_cast %13 : vector<8xf32> to vector<8x1xf32>
    %cst_10 = arith.constant 3.125000e-02 : f32
    %15 = vector.broadcast %cst_10 : f32 to vector<8x1xf32>
    %16 = arith.mulf %14, %15 : vector<8x1xf32>
    %17 = arith.mulf %12, %12 : vector<8x128xf32>
    %cst_11 = arith.constant dense<0.000000e+00> : vector<8xf32>
    %18 = vector.multi_reduction <add>, %17, %cst_11 [1] : vector<8x128xf32> to vector<8xf32>
    %19 = vector.shape_cast %18 : vector<8xf32> to vector<8x1xf32>
    %cst_12 = arith.constant 3.125000e-02 : f32
    %20 = vector.broadcast %cst_12 : f32 to vector<8x1xf32>
    %21 = arith.mulf %19, %20 : vector<8x1xf32>
    %22 = arith.mulf %16, %16 : vector<8x1xf32>
    %23 = arith.subf %21, %22 : vector<8x1xf32>
    %24 = vector.broadcast %16 : vector<8x1xf32> to vector<8x128xf32>
    %25 = arith.subf %12, %24 : vector<8x128xf32>
    %cst_13 = arith.constant 9.99999974E-6 : f32
    %26 = vector.broadcast %cst_13 : f32 to vector<8x1xf32>
    %27 = arith.addf %23, %26 : vector<8x1xf32>
    %28 = math.rsqrt %27 : vector<8x1xf32>
    %29 = vector.broadcast %28 : vector<8x1xf32> to vector<8x128xf32>
    %30 = arith.mulf %25, %29 : vector<8x128xf32>
    %31 = vector.broadcast %3 : vector<1x128xf32> to vector<8x128xf32>
    %32 = arith.mulf %30, %31 : vector<8x128xf32>
    %33 = vector.broadcast %4 : vector<1x128xf32> to vector<8x128xf32>
    %34 = arith.addf %32, %33 : vector<8x128xf32>
    %c0_14 = arith.constant 0 : index
    %c0_15 = arith.constant 0 : index
    %35 = vector.load %arg3[%c0_14, %c0_15] : memref<128x128xf32, #tpu.memory_space<vmem>>, vector<128x128xf32>
    %c3 = arith.constant 3 : index
    %c0_16 = arith.constant 0 : index
    %36 = vector.load %arg5[%c3, %c0_16] : memref<7x128xf32, #tpu.memory_space<vmem>>, vector<1x128xf32>
    %c4 = arith.constant 4 : index
    %c0_17 = arith.constant 0 : index
    %37 = vector.load %arg5[%c4, %c0_17] : memref<7x128xf32, #tpu.memory_space<vmem>>, vector<1x128xf32>
    %c5 = arith.constant 5 : index
    %c0_18 = arith.constant 0 : index
    %38 = vector.load %arg5[%c5, %c0_18] : memref<7x128xf32, #tpu.memory_space<vmem>>, vector<1x128xf32>
    %cst_19 = arith.constant dense<0.000000e+00> : vector<8x128xf32>
    %39 = tpu.matmul %34, %35, %cst_19 {dimension_numbers = #tpu.dot_dimension_numbers<[1], [0], [0], [1], [0, 0, 1, 1], [], []>} : vector<8x128xf32>, vector<128x128xf32>, vector<8x128xf32> -> vector<8x128xf32>
    %40 = vector.broadcast %36 : vector<1x128xf32> to vector<8x128xf32>
    %41 = arith.addf %39, %40 : vector<8x128xf32>
    %cst_20 = arith.constant 0.000000e+00 : f32
    %42 = vector.broadcast %cst_20 : f32 to vector<8x128xf32>
    %43 = arith.cmpf oge, %41, %42 : vector<8x128xf32>
    %cst_21 = arith.constant 0.00999999977 : f32
    %44 = vector.broadcast %cst_21 : f32 to vector<8x128xf32>
    %45 = arith.mulf %44, %41 : vector<8x128xf32>
    %46 = arith.select %43, %41, %45 : vector<8x128xi1>, vector<8x128xf32>
    %cst_22 = arith.constant dense<0.000000e+00> : vector<8xf32>
    %47 = vector.multi_reduction <add>, %46, %cst_22 [1] : vector<8x128xf32> to vector<8xf32>
    %48 = vector.shape_cast %47 : vector<8xf32> to vector<8x1xf32>
    %cst_23 = arith.constant 3.125000e-02 : f32
    %49 = vector.broadcast %cst_23 : f32 to vector<8x1xf32>
    %50 = arith.mulf %48, %49 : vector<8x1xf32>
    %51 = arith.mulf %46, %46 : vector<8x128xf32>
    %cst_24 = arith.constant dense<0.000000e+00> : vector<8xf32>
    %52 = vector.multi_reduction <add>, %51, %cst_24 [1] : vector<8x128xf32> to vector<8xf32>
    %53 = vector.shape_cast %52 : vector<8xf32> to vector<8x1xf32>
    %cst_25 = arith.constant 3.125000e-02 : f32
    %54 = vector.broadcast %cst_25 : f32 to vector<8x1xf32>
    %55 = arith.mulf %53, %54 : vector<8x1xf32>
    %56 = arith.mulf %50, %50 : vector<8x1xf32>
    %57 = arith.subf %55, %56 : vector<8x1xf32>
    %58 = vector.broadcast %50 : vector<8x1xf32> to vector<8x128xf32>
    %59 = arith.subf %46, %58 : vector<8x128xf32>
    %cst_26 = arith.constant 9.99999974E-6 : f32
    %60 = vector.broadcast %cst_26 : f32 to vector<8x1xf32>
    %61 = arith.addf %57, %60 : vector<8x1xf32>
    %62 = math.rsqrt %61 : vector<8x1xf32>
    %63 = vector.broadcast %62 : vector<8x1xf32> to vector<8x128xf32>
    %64 = arith.mulf %59, %63 : vector<8x128xf32>
    %65 = vector.broadcast %37 : vector<1x128xf32> to vector<8x128xf32>
    %66 = arith.mulf %64, %65 : vector<8x128xf32>
    %67 = vector.broadcast %38 : vector<1x128xf32> to vector<8x128xf32>
    %68 = arith.addf %66, %67 : vector<8x128xf32>
    %c0_27 = arith.constant 0 : index
    %c0_28 = arith.constant 0 : index
    %69 = vector.load %arg4[%c0_27, %c0_28] : memref<128x128xf32, #tpu.memory_space<vmem>>, vector<128x128xf32>
    %c6 = arith.constant 6 : index
    %c0_29 = arith.constant 0 : index
    %70 = vector.load %arg5[%c6, %c0_29] : memref<7x128xf32, #tpu.memory_space<vmem>>, vector<1x128xf32>
    %cst_30 = arith.constant dense<0.000000e+00> : vector<8x128xf32>
    %71 = tpu.matmul %68, %69, %cst_30 {dimension_numbers = #tpu.dot_dimension_numbers<[1], [0], [0], [1], [0, 0, 1, 1], [], []>} : vector<8x128xf32>, vector<128x128xf32>, vector<8x128xf32> -> vector<8x128xf32>
    %72 = vector.broadcast %70 : vector<1x128xf32> to vector<8x128xf32>
    %73 = arith.addf %71, %72 : vector<8x128xf32>
    %c0_31 = arith.constant 0 : index
    %c0_32 = arith.constant 0 : index
    %74 = vector.load %arg6[%c0_31, %c0_32] : memref<8x128xf32, #tpu.memory_space<vmem>>, vector<8x128xf32>
    tpu.vector_store %arg6[%c0_31, %c0_32], %73 {strides = array<i32>} : memref<8x128xf32, #tpu.memory_space<vmem>>, vector<8x128xf32>,
    return
  }
  func.func @transform_0(%arg0: i32) -> (i32, i32) {
    %c0_i32 = arith.constant 0 : i32
    %c0_i32_0 = arith.constant 0 : i32
    return %arg0, %c0_i32 : i32, i32
  }
  func.func @transform_1(%arg0: i32) -> (i32, i32) {
    %c0_i32 = arith.constant 0 : i32
    %c0_i32_0 = arith.constant 0 : i32
    %c0_i32_1 = arith.constant 0 : i32
    return %c0_i32, %c0_i32_0 : i32, i32
  }
  func.func @transform_2(%arg0: i32) -> (i32, i32) {
    %c0_i32 = arith.constant 0 : i32
    %c0_i32_0 = arith.constant 0 : i32
    %c0_i32_1 = arith.constant 0 : i32
    return %c0_i32, %c0_i32_0 : i32, i32
  }
  func.func @transform_3(%arg0: i32) -> (i32, i32) {
    %c0_i32 = arith.constant 0 : i32
    %c0_i32_0 = arith.constant 0 : i32
    %c0_i32_1 = arith.constant 0 : i32
    return %c0_i32, %c0_i32_0 : i32, i32
  }
  func.func @transform_4(%arg0: i32) -> (i32, i32) {
    %c0_i32 = arith.constant 0 : i32
    %c0_i32_0 = arith.constant 0 : i32
    %c0_i32_1 = arith.constant 0 : i32
    return %c0_i32, %c0_i32_0 : i32, i32
  }
  func.func @transform_5(%arg0: i32) -> (i32, i32) {
    %c0_i32 = arith.constant 0 : i32
    %c0_i32_0 = arith.constant 0 : i32
    return %arg0, %c0_i32 : i32, i32
  }
}

</mosaic_0001>

<llo_original>
// kernel: mlp_forward.1
$region0: #{mlp_forward.1}
  #allocation0 [shape = 'u32[]', space=smem, size = 0x4, offset = 0x4, fixed_abs, tag = 'smem constant byte address 0x4 - core index']
  #allocation1 [shape = 'u32[144,128]{1,0:T(1,128)}', space=vmem, size = 0x12000, scoped, tag = 'internal scratch']
  %s0 = inlined_call_operand.vmem [shape: f32[8,784], index: 0, kind: input, shape index: {}]
  %s1 = inlined_call_operand.vmem [shape: f32[784,128], index: 1, kind: input, shape index: {}]
  %s2 = inlined_call_operand.vmem [shape: f32[128,128], index: 2, kind: input, shape index: {}]
  %s3 = inlined_call_operand.vmem [shape: f32[128,128], index: 3, kind: input, shape index: {}]
  %s4 = inlined_call_operand.vmem [shape: f32[7,128], index: 4, kind: input, shape index: {}]
  %s5 = inlined_call_operand.vmem [shape: f32[8,128], index: 5, kind: output, shape index: {}]
  %s6 = sld [smem:[#allocation0]]
  $region30: #{mlp_forward.1} parent=0
    _
  %s8 = ssub.s32 1, %s6
  %s9 = scalar_select 0, %s8, %s6
  // Predicated region
  $region2: #{mlp_forward.1} parent=0 // pred_check
    _
  $region3: #{mlp_forward.1} parent=0 // pred_check_branch
    %11 = sbr.rel (0) target = $region5
  $region4: #{mlp_forward.1} parent=0 // pred_region
    _
  $region5: #{mlp_forward.1} parent=0 // pred_fallthru
    _
  // Predicated region
  $region6: #{mlp_forward.1} parent=0 // pred_check
    _
  $region7: #{mlp_forward.1} parent=0 // pred_check_branch
    %13 = sbr.rel (0) target = $region9
  $region8: #{mlp_forward.1} parent=0 // pred_region
    _
  $region9: #{mlp_forward.1} parent=0 // pred_fallthru
    _
  // Predicated region
  $region10: #{mlp_forward.1} parent=0 // pred_check
    _
  $region11: #{mlp_forward.1} parent=0 // pred_check_branch
    %15 = sbr.rel (0) target = $region13
  $region12: #{mlp_forward.1} parent=0 // pred_region
    _
  $region13: #{mlp_forward.1} parent=0 // pred_fallthru
    _
  // Predicated region
  $region14: #{mlp_forward.1} parent=0 // pred_check
    _
  $region15: #{mlp_forward.1} parent=0 // pred_check_branch
    %17 = sbr.rel (0) target = $region17
  $region16: #{mlp_forward.1} parent=0 // pred_region
    _
  $region17: #{mlp_forward.1} parent=0 // pred_fallthru
    _
  // Predicated region
  $region18: #{mlp_forward.1} parent=0 // pred_check
    _
  $region19: #{mlp_forward.1} parent=0 // pred_check_branch
    %19 = sbr.rel (0) target = $region21
  $region20: #{mlp_forward.1} parent=0 // pred_region
    _
  $region21: #{mlp_forward.1} parent=0 // pred_fallthru
    _
  %v20 = vld [vmem:[%s0] sm:$0xff]
  %v21 = vld [vmem:[%s0 + $0x8] sm:$0xff]
  %v22 = vld [vmem:[%s0 + $0x10] sm:$0xff]
  %v23 = vld [vmem:[%s0 + $0x18] sm:$0xff]
  %v24 = vld [vmem:[%s0 + $0x20] sm:$0xff]
  %v25 = vld [vmem:[%s0 + $0x28] sm:$0xff]
  %v26 = vld [vmem:[%s0 + $0x30] sm:$0xff]
  %v27 = vld [vmem:[%s1] sm:$0xff]
  %v28 = vld [vmem:[%s1 + $0x8] sm:$0xff]
  %v29 = vld [vmem:[%s1 + $0x10] sm:$0xff]
  %v30 = vld [vmem:[%s1 + $0x18] sm:$0xff]
  %v31 = vld [vmem:[%s1 + $0x20] sm:$0xff]
  %v32 = vld [vmem:[%s1 + $0x28] sm:$0xff]
  %v33 = vld [vmem:[%s1 + $0x30] sm:$0xff]
  %v34 = vld [vmem:[%s1 + $0x38] sm:$0xff]
  %v35 = vld [vmem:[%s1 + $0x40] sm:$0xff]
  %v36 = vld [vmem:[%s1 + $0x48] sm:$0xff]
  %v37 = vld [vmem:[%s1 + $0x50] sm:$0xff]
  %v38 = vld [vmem:[%s1 + $0x58] sm:$0xff]
  %v39 = vld [vmem:[%s1 + $0x60] sm:$0xff]
  %v40 = vld [vmem:[%s1 + $0x68] sm:$0xff]
  %v41 = vld [vmem:[%s1 + $0x70] sm:$0xff]
  %v42 = vld [vmem:[%s1 + $0x78] sm:$0xff]
  %v43 = vld [vmem:[%s1 + $0x80] sm:$0xff]
  %v44 = vld [vmem:[%s1 + $0x88] sm:$0xff]
  %v45 = vld [vmem:[%s1 + $0x90] sm:$0xff]
  %v46 = vld [vmem:[%s1 + $0x98] sm:$0xff]
  %v47 = vld [vmem:[%s1 + $0xa0] sm:$0xff]
  %v48 = vld [vmem:[%s1 + $0xa8] sm:$0xff]
  %v49 = vld [vmem:[%s1 + $0xb0] sm:$0xff]
  %v50 = vld [vmem:[%s1 + $0xb8] sm:$0xff]
  %v51 = vld [vmem:[%s1 + $0xc0] sm:$0xff]
  %v52 = vld [vmem:[%s1 + $0xc8] sm:$0xff]
  %v53 = vld [vmem:[%s1 + $0xd0] sm:$0xff]
  %v54 = vld [vmem:[%s1 + $0xd8] sm:$0xff]
  %v55 = vld [vmem:[%s1 + $0xe0] sm:$0xff]
  %v56 = vld [vmem:[%s1 + $0xe8] sm:$0xff]
  %v57 = vld [vmem:[%s1 + $0xf0] sm:$0xff]
  %v58 = vld [vmem:[%s1 + $0xf8] sm:$0xff]
  %v59 = vld [vmem:[%s1 + $0x100] sm:$0xff]
  %v60 = vld [vmem:[%s1 + $0x108] sm:$0xff]
  %v61 = vld [vmem:[%s1 + $0x110] sm:$0xff]
  %v62 = vld [vmem:[%s1 + $0x118] sm:$0xff]
  %v63 = vld [vmem:[%s1 + $0x120] sm:$0xff]
  %v64 = vld [vmem:[%s1 + $0x128] sm:$0xff]
  %v65 = vld [vmem:[%s1 + $0x130] sm:$0xff]
  %v66 = vld [vmem:[%s1 + $0x138] sm:$0xff]
  %v67 = vld [vmem:[%s1 + $0x140] sm:$0xff]
  %v68 = vld [vmem:[%s1 + $0x148] sm:$0xff]
  %v69 = vld [vmem:[%s1 + $0x150] sm:$0xff]
  %v70 = vld [vmem:[%s1 + $0x158] sm:$0xff]
  %v71 = vld [vmem:[%s1 + $0x160] sm:$0xff]
  %v72 = vld [vmem:[%s1 + $0x168] sm:$0xff]
  %v73 = vld [vmem:[%s1 + $0x170] sm:$0xff]
  %v74 = vld [vmem:[%s1 + $0x178] sm:$0xff]
  %v75 = vld [vmem:[%s1 + $0x180] sm:$0xff]
  %v76 = vld [vmem:[%s1 + $0x188] sm:$0xff]
  %v77 = vld [vmem:[%s1 + $0x190] sm:$0xff]
  %v78 = vld [vmem:[%s1 + $0x198] sm:$0xff]
  %v79 = vld [vmem:[%s1 + $0x1a0] sm:$0xff]
  %v80 = vld [vmem:[%s1 + $0x1a8] sm:$0xff]
  %v81 = vld [vmem:[%s1 + $0x1b0] sm:$0xff]
  %v82 = vld [vmem:[%s1 + $0x1b8] sm:$0xff]
  %v83 = vld [vmem:[%s1 + $0x1c0] sm:$0xff]
  %v84 = vld [vmem:[%s1 + $0x1c8] sm:$0xff]
  %v85 = vld [vmem:[%s1 + $0x1d0] sm:$0xff]
  %v86 = vld [vmem:[%s1 + $0x1d8] sm:$0xff]
  %v87 = vld [vmem:[%s1 + $0x1e0] sm:$0xff]
  %v88 = vld [vmem:[%s1 + $0x1e8] sm:$0xff]
  %v89 = vld [vmem:[%s1 + $0x1f0] sm:$0xff]
  %v90 = vld [vmem:[%s1 + $0x1f8] sm:$0xff]
  %v91 = vld [vmem:[%s1 + $0x200] sm:$0xff]
  %v92 = vld [vmem:[%s1 + $0x208] sm:$0xff]
  %v93 = vld [vmem:[%s1 + $0x210] sm:$0xff]
  %v94 = vld [vmem:[%s1 + $0x218] sm:$0xff]
  %v95 = vld [vmem:[%s1 + $0x220] sm:$0xff]
  %v96 = vld [vmem:[%s1 + $0x228] sm:$0xff]
  %v97 = vld [vmem:[%s1 + $0x230] sm:$0xff]
  %v98 = vld [vmem:[%s1 + $0x238] sm:$0xff]
  %v99 = vld [vmem:[%s1 + $0x240] sm:$0xff]
  %v100 = vld [vmem:[%s1 + $0x248] sm:$0xff]
  %v101 = vld [vmem:[%s1 + $0x250] sm:$0xff]
  %v102 = vld [vmem:[%s1 + $0x258] sm:$0xff]
  %v103 = vld [vmem:[%s1 + $0x260] sm:$0xff]
  %v104 = vld [vmem:[%s1 + $0x268] sm:$0xff]
  %v105 = vld [vmem:[%s1 + $0x270] sm:$0xff]
  %v106 = vld [vmem:[%s1 + $0x278] sm:$0xff]
  %v107 = vld [vmem:[%s1 + $0x280] sm:$0xff]
  %v108 = vld [vmem:[%s1 + $0x288] sm:$0xff]
  %v109 = vld [vmem:[%s1 + $0x290] sm:$0xff]
  %v110 = vld [vmem:[%s1 + $0x298] sm:$0xff]
  %v111 = vld [vmem:[%s1 + $0x2a0] sm:$0xff]
  %v112 = vld [vmem:[%s1 + $0x2a8] sm:$0xff]
  %v113 = vld [vmem:[%s1 + $0x2b0] sm:$0xff]
  %v114 = vld [vmem:[%s1 + $0x2b8] sm:$0xff]
  %v115 = vld [vmem:[%s1 + $0x2c0] sm:$0xff]
  %v116 = vld [vmem:[%s1 + $0x2c8] sm:$0xff]
  %v117 = vld [vmem:[%s1 + $0x2d0] sm:$0xff]
  %v118 = vld [vmem:[%s1 + $0x2d8] sm:$0xff]
  %v119 = vld [vmem:[%s1 + $0x2e0] sm:$0xff]
  %v120 = vld [vmem:[%s1 + $0x2e8] sm:$0xff]
  %v121 = vld [vmem:[%s1 + $0x2f0] sm:$0xff]
  %v122 = vld [vmem:[%s1 + $0x2f8] sm:$0xff]
  %v123 = vld [vmem:[%s1 + $0x300] sm:$0xff]
  %v124 = vld [vmem:[%s1 + $0x308] sm:$0xff]
  %v125 = vld [vmem:[%s4] sm:$0x1]
  %v126 = vld [vmem:[%s4 + $0x1] sm:$0x1]
  %v127 = vld [vmem:[%s4 + $0x2] sm:$0x1]
  %v128 = vlaneseq
  %v129 = vshrl.u32 %v128, 7
  %v130 = vsub.s32 0, %v129
  %v131 = vrot.slane %v125, %v130
  %vm132 = vcmask 130048
  %v134 = vsel %vm132, %v26, 0
  %136 = vmatprep.subr.mxu0 0.0
  %137 = vmatpush1.msra.mxu0 %v42
  %138 = vmatprep.subr.mxu0 0.0
  %139 = vmatpush1.msra.mxu0 %v41
  %140 = vmatprep.subr.mxu0 0.0
  %141 = vmatpush1.msra.mxu0 %v40
  %142 = vmatprep.subr.mxu0 0.0
  %143 = vmatpush1.msra.mxu0 %v39
  %144 = vmatprep.subr.mxu0 0.0
  %145 = vmatpush1.msra.mxu0 %v38
  %146 = vmatprep.subr.mxu0 0.0
  %147 = vmatpush1.msra.mxu0 %v37
  %148 = vmatprep.subr.mxu0 0.0
  %149 = vmatpush1.msra.mxu0 %v36
  %150 = vmatprep.subr.mxu0 0.0
  %151 = vmatpush1.msra.mxu0 %v35
  %152 = vmatprep.subr.mxu0 0.0
  %153 = vmatpush1.msra.mxu0 %v34
  %154 = vmatprep.subr.mxu0 0.0
  %155 = vmatpush1.msra.mxu0 %v33
  %156 = vmatprep.subr.mxu0 0.0
  %157 = vmatpush1.msra.mxu0 %v32
  %158 = vmatprep.subr.mxu0 0.0
  %159 = vmatpush1.msra.mxu0 %v31
  %160 = vmatprep.subr.mxu0 0.0
  %161 = vmatpush1.msra.mxu0 %v30
  %162 = vmatprep.subr.mxu0 0.0
  %163 = vmatpush1.msra.mxu0 %v29
  %164 = vmatprep.subr.mxu0 0.0
  %165 = vmatpush1.msra.mxu0 %v28
  %166 = vmatprep.subr.mxu0 0.0
  %167 = vmatpush1.msra.mxu0 %v27
  %168 = vmatprep.subr.mxu0 0.0
  %169 = vmatpush2.msra.mxu0 %v58
  %170 = vmatprep.subr.mxu0 0.0
  %171 = vmatpush2.msra.mxu0 %v57
  %172 = vmatprep.subr.mxu0 0.0
  %173 = vmatpush2.msra.mxu0 %v56
  %174 = vmatprep.subr.mxu0 0.0
  %175 = vmatpush2.msra.mxu0 %v55
  %176 = vmatprep.subr.mxu0 0.0
  %177 = vmatpush2.msra.mxu0 %v54
  %178 = vmatprep.subr.mxu0 0.0
  %179 = vmatpush2.msra.mxu0 %v53
  %180 = vmatprep.subr.mxu0 0.0
  %181 = vmatpush2.msra.mxu0 %v52
  %182 = vmatprep.subr.mxu0 0.0
  %183 = vmatpush2.msra.mxu0 %v51
  %184 = vmatprep.subr.mxu0 0.0
  %185 = vmatpush2.msra.mxu0 %v50
  %186 = vmatprep.subr.mxu0 0.0
  %187 = vmatpush2.msra.mxu0 %v49
  %188 = vmatprep.subr.mxu0 0.0
  %189 = vmatpush2.msra.mxu0 %v48
  %190 = vmatprep.subr.mxu0 0.0
  %191 = vmatpush2.msra.mxu0 %v47
  %192 = vmatprep.subr.mxu0 0.0
  %193 = vmatpush2.msra.mxu0 %v46
  %194 = vmatprep.subr.mxu0 0.0
  %195 = vmatpush2.msra.mxu0 %v45
  %196 = vmatprep.subr.mxu0 0.0
  %197 = vmatpush2.msra.mxu0 %v44
  %198 = vmatprep.subr.mxu0 0.0
  %199 = vmatpush2.msra.mxu0 %v43
  %200 = vmatprep.mubr.f32.mxu0 %v21
  %201 = vmatmul.mubr.f32.gmra.mxu0 %v20
  %v202 = vpop.f32.mrf.mxu0
  %v203 = vadd.f32 %v131, %v202
  %v204 = vpop.f32.mrf.mxu0
  %205 = vdwg.mxu0
  %206 = vmatprep.subr.mxu0 0.0
  %207 = vmatpush1.msra.mxu0 %v74
  %208 = vmatprep.subr.mxu0 0.0
  %209 = vmatpush1.msra.mxu0 %v73
  %210 = vmatprep.subr.mxu0 0.0
  %211 = vmatpush1.msra.mxu0 %v72
  %212 = vmatprep.subr.mxu0 0.0
  %213 = vmatpush1.msra.mxu0 %v71
  %214 = vmatprep.subr.mxu0 0.0
  %215 = vmatpush1.msra.mxu0 %v70
  %216 = vmatprep.subr.mxu0 0.0
  %217 = vmatpush1.msra.mxu0 %v69
  %218 = vmatprep.subr.mxu0 0.0
  %219 = vmatpush1.msra.mxu0 %v68
  %220 = vmatprep.subr.mxu0 0.0
  %221 = vmatpush1.msra.mxu0 %v67
  %222 = vmatprep.subr.mxu0 0.0
  %223 = vmatpush1.msra.mxu0 %v66
  %224 = vmatprep.subr.mxu0 0.0
  %225 = vmatpush1.msra.mxu0 %v65
  %226 = vmatprep.subr.mxu0 0.0
  %227 = vmatpush1.msra.mxu0 %v64
  %228 = vmatprep.subr.mxu0 0.0
  %229 = vmatpush1.msra.mxu0 %v63
  %230 = vmatprep.subr.mxu0 0.0
  %231 = vmatpush1.msra.mxu0 %v62
  %232 = vmatprep.subr.mxu0 0.0
  %233 = vmatpush1.msra.mxu0 %v61
  %234 = vmatprep.subr.mxu0 0.0
  %235 = vmatpush1.msra.mxu0 %v60
  %236 = vmatprep.subr.mxu0 0.0
  %237 = vmatpush1.msra.mxu0 %v59
  %238 = vmatprep.subr.mxu0 0.0
  %239 = vmatpush2.msra.mxu0 %v90
  %240 = vmatprep.subr.mxu0 0.0
  %241 = vmatpush2.msra.mxu0 %v89
  %242 = vmatprep.subr.mxu0 0.0
  %243 = vmatpush2.msra.mxu0 %v88
  %244 = vmatprep.subr.mxu0 0.0
  %245 = vmatpush2.msra.mxu0 %v87
  %246 = vmatprep.subr.mxu0 0.0
  %247 = vmatpush2.msra.mxu0 %v86
  %248 = vmatprep.subr.mxu0 0.0
  %249 = vmatpush2.msra.mxu0 %v85
  %250 = vmatprep.subr.mxu0 0.0
  %251 = vmatpush2.msra.mxu0 %v84
  %252 = vmatprep.subr.mxu0 0.0
  %253 = vmatpush2.msra.mxu0 %v83
  %254 = vmatprep.subr.mxu0 0.0
  %255 = vmatpush2.msra.mxu0 %v82
  %256 = vmatprep.subr.mxu0 0.0
  %257 = vmatpush2.msra.mxu0 %v81
  %258 = vmatprep.subr.mxu0 0.0
  %259 = vmatpush2.msra.mxu0 %v80
  %260 = vmatprep.subr.mxu0 0.0
  %261 = vmatpush2.msra.mxu0 %v79
  %262 = vmatprep.subr.mxu0 0.0
  %263 = vmatpush2.msra.mxu0 %v78
  %264 = vmatprep.subr.mxu0 0.0
  %265 = vmatpush2.msra.mxu0 %v77
  %266 = vmatprep.subr.mxu0 0.0
  %267 = vmatpush2.msra.mxu0 %v76
  %268 = vmatprep.subr.mxu0 0.0
  %269 = vmatpush2.msra.mxu0 %v75
  %270 = vmatprep.mubr.f32.mxu0 %v23
  %271 = vmatmul.mubr.f32.gmra.mxu0 %v22
  %v272 = vpop.f32.mrf.mxu0
  %v273 = vadd.f32 %v203, %v272
  %v274 = vpop.f32.mrf.mxu0
  %275 = vdwg.mxu0
  %276 = vmatprep.subr.mxu0 0.0
  %277 = vmatpush1.msra.mxu0 %v106
  %278 = vmatprep.subr.mxu0 0.0
  %279 = vmatpush1.msra.mxu0 %v105
  %280 = vmatprep.subr.mxu0 0.0
  %281 = vmatpush1.msra.mxu0 %v104
  %282 = vmatprep.subr.mxu0 0.0
  %283 = vmatpush1.msra.mxu0 %v103
  %284 = vmatprep.subr.mxu0 0.0
  %285 = vmatpush1.msra.mxu0 %v102
  %286 = vmatprep.subr.mxu0 0.0
  %287 = vmatpush1.msra.mxu0 %v101
  %288 = vmatprep.subr.mxu0 0.0
  %289 = vmatpush1.msra.mxu0 %v100
  %290 = vmatprep.subr.mxu0 0.0
  %291 = vmatpush1.msra.mxu0 %v99
  %292 = vmatprep.subr.mxu0 0.0
  %293 = vmatpush1.msra.mxu0 %v98
  %294 = vmatprep.subr.mxu0 0.0
  %295 = vmatpush1.msra.mxu0 %v97
  %296 = vmatprep.subr.mxu0 0.0
  %297 = vmatpush1.msra.mxu0 %v96
  %298 = vmatprep.subr.mxu0 0.0
  %299 = vmatpush1.msra.mxu0 %v95
  %300 = vmatprep.subr.mxu0 0.0
  %301 = vmatpush1.msra.mxu0 %v94
  %302 = vmatprep.subr.mxu0 0.0
  %303 = vmatpush1.msra.mxu0 %v93
  %304 = vmatprep.subr.mxu0 0.0
  %305 = vmatpush1.msra.mxu0 %v92
  %306 = vmatprep.subr.mxu0 0.0
  %307 = vmatpush1.msra.mxu0 %v91
  %308 = vmatprep.subr.mxu0 0.0
  %309 = vmatpush2.msra.mxu0 %v122
  %310 = vmatprep.subr.mxu0 0.0
  %311 = vmatpush2.msra.mxu0 %v121
  %312 = vmatprep.subr.mxu0 0.0
  %313 = vmatpush2.msra.mxu0 %v120
  %314 = vmatprep.subr.mxu0 0.0
  %315 = vmatpush2.msra.mxu0 %v119
  %316 = vmatprep.subr.mxu0 0.0
  %317 = vmatpush2.msra.mxu0 %v118
  %318 = vmatprep.subr.mxu0 0.0
  %319 = vmatpush2.msra.mxu0 %v117
  %320 = vmatprep.subr.mxu0 0.0
  %321 = vmatpush2.msra.mxu0 %v116
  %322 = vmatprep.subr.mxu0 0.0
  %323 = vmatpush2.msra.mxu0 %v115
  %324 = vmatprep.subr.mxu0 0.0
  %325 = vmatpush2.msra.mxu0 %v114
  %326 = vmatprep.subr.mxu0 0.0
  %327 = vmatpush2.msra.mxu0 %v113
  %328 = vmatprep.subr.mxu0 0.0
  %329 = vmatpush2.msra.mxu0 %v112
  %330 = vmatprep.subr.mxu0 0.0
  %331 = vmatpush2.msra.mxu0 %v111
  %332 = vmatprep.subr.mxu0 0.0
  %333 = vmatpush2.msra.mxu0 %v110
  %334 = vmatprep.subr.mxu0 0.0
  %335 = vmatpush2.msra.mxu0 %v109
  %336 = vmatprep.subr.mxu0 0.0
  %337 = vmatpush2.msra.mxu0 %v108
  %338 = vmatprep.subr.mxu0 0.0
  %339 = vmatpush2.msra.mxu0 %v107
  %340 = vmatprep.mubr.f32.mxu0 %v25
  %341 = vmatmul.mubr.f32.gmra.mxu0 %v24
  %v342 = vpop.f32.mrf.mxu0
  %v343 = vadd.f32 %v273, %v342
  %v344 = vpop.f32.mrf.mxu0
  %345 = vdwg.mxu0
  %346 = vmatprep.subr.mxu0 0.0
  %347 = vmatpush1.msra.mxu0 0.0
  %348 = vmatprep.subr.mxu0 0.0
  %349 = vmatpush1.msra.mxu0 0.0
  %350 = vmatprep.subr.mxu0 0.0
  %351 = vmatpush1.msra.mxu0 0.0
  %352 = vmatprep.subr.mxu0 0.0
  %353 = vmatpush1.msra.mxu0 0.0
  %354 = vmatprep.subr.mxu0 0.0
  %355 = vmatpush1.msra.mxu0 0.0
  %356 = vmatprep.subr.mxu0 0.0
  %357 = vmatpush1.msra.mxu0 0.0
  %358 = vmatprep.subr.mxu0 0.0
  %359 = vmatpush1.msra.mxu0 0.0
  %360 = vmatprep.subr.mxu0 0.0
  %361 = vmatpush1.msra.mxu0 0.0
  %362 = vmatprep.subr.mxu0 0.0
  %363 = vmatpush1.msra.mxu0 0.0
  %364 = vmatprep.subr.mxu0 0.0
  %365 = vmatpush1.msra.mxu0 0.0
  %366 = vmatprep.subr.mxu0 0.0
  %367 = vmatpush1.msra.mxu0 0.0
  %368 = vmatprep.subr.mxu0 0.0
  %369 = vmatpush1.msra.mxu0 0.0
  %370 = vmatprep.subr.mxu0 0.0
  %371 = vmatpush1.msra.mxu0 0.0
  %372 = vmatprep.subr.mxu0 0.0
  %373 = vmatpush1.msra.mxu0 0.0
  %374 = vmatprep.subr.mxu0 0.0
  %375 = vmatpush1.msra.mxu0 %v124
  %376 = vmatprep.subr.mxu0 0.0
  %377 = vmatpush1.msra.mxu0 %v123
  %378 = vmatprep.subr.mxu0 0.0
  %379 = vmatpush2.msra.mxu0 0.0
  %380 = vmatprep.subr.mxu0 0.0
  %381 = vmatpush2.msra.mxu0 0.0
  %382 = vmatprep.subr.mxu0 0.0
  %383 = vmatpush2.msra.mxu0 0.0
  %384 = vmatprep.subr.mxu0 0.0
  %385 = vmatpush2.msra.mxu0 0.0
  %386 = vmatprep.subr.mxu0 0.0
  %387 = vmatpush2.msra.mxu0 0.0
  %388 = vmatprep.subr.mxu0 0.0
  %389 = vmatpush2.msra.mxu0 0.0
  %390 = vmatprep.subr.mxu0 0.0
  %391 = vmatpush2.msra.mxu0 0.0
  %392 = vmatprep.subr.mxu0 0.0
  %393 = vmatpush2.msra.mxu0 0.0
  %394 = vmatprep.subr.mxu0 0.0
  %395 = vmatpush2.msra.mxu0 0.0
  %396 = vmatprep.subr.mxu0 0.0
  %397 = vmatpush2.msra.mxu0 0.0
  %398 = vmatprep.subr.mxu0 0.0
  %399 = vmatpush2.msra.mxu0 0.0
  %400 = vmatprep.subr.mxu0 0.0
  %401 = vmatpush2.msra.mxu0 0.0
  %402 = vmatprep.subr.mxu0 0.0
  %403 = vmatpush2.msra.mxu0 0.0
  %404 = vmatprep.subr.mxu0 0.0
  %405 = vmatpush2.msra.mxu0 0.0
  %406 = vmatprep.subr.mxu0 0.0
  %407 = vmatpush2.msra.mxu0 0.0
  %408 = vmatprep.subr.mxu0 0.0
  %409 = vmatpush2.msra.mxu0 0.0
  %410 = vmatprep.mubr.f32.mxu0 0.0
  %411 = vmatmul.mubr.f32.gmra.mxu0 %v134
  %v412 = vpop.f32.mrf.mxu0
  %v413 = vadd.f32 %v343, %v412
  %v414 = vpop.f32.mrf.mxu0
  %415 = vdwg.mxu0
  %vm416 = vcmp.ge.f32.partialorder %v413, 0.0
  %v417 = vmul.f32 %v413, 0.01
  %v418 = vsel %vm416, %v413, %v417
  %419 = vadd.xlane.f32.xlu0 %v418
  %v420 = vpop.xlane.xlu0 %419
  %v421 = vmul.f32 %v420, 0.03125
  %v422 = vmul.f32 %v418, %v418
  %423 = vadd.xlane.f32.xlu0 %v422
  %v424 = vpop.xlane.xlu0 %423
  %v425 = vmul.f32 %v424, 0.03125
  %v426 = vmul.f32 %v421, %v421
  %v427 = vsub.f32 %v425, %v426
  %v428 = vsub.f32 %v418, %v421
  %v429 = vadd.f32 %v427, 1e-05
  %v430 = vrsqrt.pop %v429
  %v431 = vmul.f32 %v428, %v430
  %v432 = vlaneseq
  %v433 = vshrl.u32 %v432, 7
  %v434 = vsub.s32 0, %v433
  %v435 = vrot.slane %v126, %v434
  %v436 = vmul.f32 %v431, %v435
  %v437 = vlaneseq
  %v438 = vshrl.u32 %v437, 7
  %v439 = vsub.s32 0, %v438
  %v440 = vrot.slane %v127, %v439
  %v441 = vadd.f32 %v436, %v440
  %v442 = vld [vmem:[%s2] sm:$0xff]
  %v443 = vld [vmem:[%s2 + $0x8] sm:$0xff]
  %v444 = vld [vmem:[%s2 + $0x10] sm:$0xff]
  %v445 = vld [vmem:[%s2 + $0x18] sm:$0xff]
  %v446 = vld [vmem:[%s2 + $0x20] sm:$0xff]
  %v447 = vld [vmem:[%s2 + $0x28] sm:$0xff]
  %v448 = vld [vmem:[%s2 + $0x30] sm:$0xff]
  %v449 = vld [vmem:[%s2 + $0x38] sm:$0xff]
  %v450 = vld [vmem:[%s2 + $0x40] sm:$0xff]
  %v451 = vld [vmem:[%s2 + $0x48] sm:$0xff]
  %v452 = vld [vmem:[%s2 + $0x50] sm:$0xff]
  %v453 = vld [vmem:[%s2 + $0x58] sm:$0xff]
  %v454 = vld [vmem:[%s2 + $0x60] sm:$0xff]
  %v455 = vld [vmem:[%s2 + $0x68] sm:$0xff]
  %v456 = vld [vmem:[%s2 + $0x70] sm:$0xff]
  %v457 = vld [vmem:[%s2 + $0x78] sm:$0xff]
  %v458 = vld [vmem:[%s4 + $0x3] sm:$0x1]
  %v459 = vld [vmem:[%s4 + $0x4] sm:$0x1]
  %v460 = vld [vmem:[%s4 + $0x5] sm:$0x1]
  %v461 = vlaneseq
  %v462 = vshrl.u32 %v461, 7
  %v463 = vsub.s32 0, %v462
  %v464 = vrot.slane %v458, %v463
  %465 = vmatprep.subr.mxu0 0.0
  %466 = vmatpush1.msra.mxu0 %v457
  %467 = vmatprep.subr.mxu0 0.0
  %468 = vmatpush1.msra.mxu0 %v456
  %469 = vmatprep.subr.mxu0 0.0
  %470 = vmatpush1.msra.mxu0 %v455
  %471 = vmatprep.subr.mxu0 0.0
  %472 = vmatpush1.msra.mxu0 %v454
  %473 = vmatprep.subr.mxu0 0.0
  %474 = vmatpush1.msra.mxu0 %v453
  %475 = vmatprep.subr.mxu0 0.0
  %476 = vmatpush1.msra.mxu0 %v452
  %477 = vmatprep.subr.mxu0 0.0
  %478 = vmatpush1.msra.mxu0 %v451
  %479 = vmatprep.subr.mxu0 0.0
  %480 = vmatpush1.msra.mxu0 %v450
  %481 = vmatprep.subr.mxu0 0.0
  %482 = vmatpush1.msra.mxu0 %v449
  %483 = vmatprep.subr.mxu0 0.0
  %484 = vmatpush1.msra.mxu0 %v448
  %485 = vmatprep.subr.mxu0 0.0
  %486 = vmatpush1.msra.mxu0 %v447
  %487 = vmatprep.subr.mxu0 0.0
  %488 = vmatpush1.msra.mxu0 %v446
  %489 = vmatprep.subr.mxu0 0.0
  %490 = vmatpush1.msra.mxu0 %v445
  %491 = vmatprep.subr.mxu0 0.0
  %492 = vmatpush1.msra.mxu0 %v444
  %493 = vmatprep.subr.mxu0 0.0
  %494 = vmatpush1.msra.mxu0 %v443
  %495 = vmatprep.subr.mxu0 0.0
  %496 = vmatpush1.msra.mxu0 %v442
  %497 = vmatprep.subr.mxu0 0.0
  %498 = vmatpush2.msra.mxu0 0.0
  %499 = vmatprep.subr.mxu0 0.0
  %500 = vmatpush2.msra.mxu0 0.0
  %501 = vmatprep.subr.mxu0 0.0
  %502 = vmatpush2.msra.mxu0 0.0
  %503 = vmatprep.subr.mxu0 0.0
  %504 = vmatpush2.msra.mxu0 0.0
  %505 = vmatprep.subr.mxu0 0.0
  %506 = vmatpush2.msra.mxu0 0.0
  %507 = vmatprep.subr.mxu0 0.0
  %508 = vmatpush2.msra.mxu0 0.0
  %509 = vmatprep.subr.mxu0 0.0
  %510 = vmatpush2.msra.mxu0 0.0
  %511 = vmatprep.subr.mxu0 0.0
  %512 = vmatpush2.msra.mxu0 0.0
  %513 = vmatprep.subr.mxu0 0.0
  %514 = vmatpush2.msra.mxu0 0.0
  %515 = vmatprep.subr.mxu0 0.0
  %516 = vmatpush2.msra.mxu0 0.0
  %517 = vmatprep.subr.mxu0 0.0
  %518 = vmatpush2.msra.mxu0 0.0
  %519 = vmatprep.subr.mxu0 0.0
  %520 = vmatpush2.msra.mxu0 0.0
  %521 = vmatprep.subr.mxu0 0.0
  %522 = vmatpush2.msra.mxu0 0.0
  %523 = vmatprep.subr.mxu0 0.0
  %524 = vmatpush2.msra.mxu0 0.0
  %525 = vmatprep.subr.mxu0 0.0
  %526 = vmatpush2.msra.mxu0 0.0
  %527 = vmatprep.subr.mxu0 0.0
  %528 = vmatpush2.msra.mxu0 0.0
  %529 = vmatprep.mubr.f32.mxu0 0.0
  %530 = vmatmul.mubr.f32.gmra.mxu0 %v441
  %v531 = vpop.f32.mrf.mxu0
  %v532 = vadd.f32 %v464, %v531
  %v533 = vpop.f32.mrf.mxu0
  %534 = vdwg.mxu0
  %vm535 = vcmp.ge.f32.partialorder %v532, 0.0
  %v536 = vmul.f32 %v532, 0.01
  %v537 = vsel %vm535, %v532, %v536
  %538 = vadd.xlane.f32.xlu0 %v537
  %v539 = vpop.xlane.xlu0 %538
  %v540 = vmul.f32 %v539, 0.03125
  %v541 = vmul.f32 %v537, %v537
  %542 = vadd.xlane.f32.xlu0 %v541
  %v543 = vpop.xlane.xlu0 %542
  %v544 = vmul.f32 %v543, 0.03125
  %v545 = vmul.f32 %v540, %v540
  %v546 = vsub.f32 %v544, %v545
  %v547 = vsub.f32 %v537, %v540
  %v548 = vadd.f32 %v546, 1e-05
  %v549 = vrsqrt.pop %v548
  %v550 = vmul.f32 %v547, %v549
  %v551 = vlaneseq
  %v552 = vshrl.u32 %v551, 7
  %v553 = vsub.s32 0, %v552
  %v554 = vrot.slane %v459, %v553
  %v555 = vmul.f32 %v550, %v554
  %v556 = vlaneseq
  %v557 = vshrl.u32 %v556, 7
  %v558 = vsub.s32 0, %v557
  %v559 = vrot.slane %v460, %v558
  %v560 = vadd.f32 %v555, %v559
  %v561 = vld [vmem:[%s3] sm:$0xff]
  %v562 = vld [vmem:[%s3 + $0x8] sm:$0xff]
  %v563 = vld [vmem:[%s3 + $0x10] sm:$0xff]
  %v564 = vld [vmem:[%s3 + $0x18] sm:$0xff]
  %v565 = vld [vmem:[%s3 + $0x20] sm:$0xff]
  %v566 = vld [vmem:[%s3 + $0x28] sm:$0xff]
  %v567 = vld [vmem:[%s3 + $0x30] sm:$0xff]
  %v568 = vld [vmem:[%s3 + $0x38] sm:$0xff]
  %v569 = vld [vmem:[%s3 + $0x40] sm:$0xff]
  %v570 = vld [vmem:[%s3 + $0x48] sm:$0xff]
  %v571 = vld [vmem:[%s3 + $0x50] sm:$0xff]
  %v572 = vld [vmem:[%s3 + $0x58] sm:$0xff]
  %v573 = vld [vmem:[%s3 + $0x60] sm:$0xff]
  %v574 = vld [vmem:[%s3 + $0x68] sm:$0xff]
  %v575 = vld [vmem:[%s3 + $0x70] sm:$0xff]
  %v576 = vld [vmem:[%s3 + $0x78] sm:$0xff]
  %v577 = vld [vmem:[%s4 + $0x6] sm:$0x1]
  %v578 = vlaneseq
  %v579 = vshrl.u32 %v578, 7
  %v580 = vsub.s32 0, %v579
  %v581 = vrot.slane %v577, %v580
  %582 = vmatprep.subr.mxu0 0.0
  %583 = vmatpush1.msra.mxu0 %v576
  %584 = vmatprep.subr.mxu0 0.0
  %585 = vmatpush1.msra.mxu0 %v575
  %586 = vmatprep.subr.mxu0 0.0
  %587 = vmatpush1.msra.mxu0 %v574
  %588 = vmatprep.subr.mxu0 0.0
  %589 = vmatpush1.msra.mxu0 %v573
  %590 = vmatprep.subr.mxu0 0.0
  %591 = vmatpush1.msra.mxu0 %v572
  %592 = vmatprep.subr.mxu0 0.0
  %593 = vmatpush1.msra.mxu0 %v571
  %594 = vmatprep.subr.mxu0 0.0
  %595 = vmatpush1.msra.mxu0 %v570
  %596 = vmatprep.subr.mxu0 0.0
  %597 = vmatpush1.msra.mxu0 %v569
  %598 = vmatprep.subr.mxu0 0.0
  %599 = vmatpush1.msra.mxu0 %v568
  %600 = vmatprep.subr.mxu0 0.0
  %601 = vmatpush1.msra.mxu0 %v567
  %602 = vmatprep.subr.mxu0 0.0
  %603 = vmatpush1.msra.mxu0 %v566
  %604 = vmatprep.subr.mxu0 0.0
  %605 = vmatpush1.msra.mxu0 %v565
  %606 = vmatprep.subr.mxu0 0.0
  %607 = vmatpush1.msra.mxu0 %v564
  %608 = vmatprep.subr.mxu0 0.0
  %609 = vmatpush1.msra.mxu0 %v563
  %610 = vmatprep.subr.mxu0 0.0
  %611 = vmatpush1.msra.mxu0 %v562
  %612 = vmatprep.subr.mxu0 0.0
  %613 = vmatpush1.msra.mxu0 %v561
  %614 = vmatprep.subr.mxu0 0.0
  %615 = vmatpush2.msra.mxu0 0.0
  %616 = vmatprep.subr.mxu0 0.0
  %617 = vmatpush2.msra.mxu0 0.0
  %618 = vmatprep.subr.mxu0 0.0
  %619 = vmatpush2.msra.mxu0 0.0
  %620 = vmatprep.subr.mxu0 0.0
  %621 = vmatpush2.msra.mxu0 0.0
  %622 = vmatprep.subr.mxu0 0.0
  %623 = vmatpush2.msra.mxu0 0.0
  %624 = vmatprep.subr.mxu0 0.0
  %625 = vmatpush2.msra.mxu0 0.0
  %626 = vmatprep.subr.mxu0 0.0
  %627 = vmatpush2.msra.mxu0 0.0
  %628 = vmatprep.subr.mxu0 0.0
  %629 = vmatpush2.msra.mxu0 0.0
  %630 = vmatprep.subr.mxu0 0.0
  %631 = vmatpush2.msra.mxu0 0.0
  %632 = vmatprep.subr.mxu0 0.0
  %633 = vmatpush2.msra.mxu0 0.0
  %634 = vmatprep.subr.mxu0 0.0
  %635 = vmatpush2.msra.mxu0 0.0
  %636 = vmatprep.subr.mxu0 0.0
  %637 = vmatpush2.msra.mxu0 0.0
  %638 = vmatprep.subr.mxu0 0.0
  %639 = vmatpush2.msra.mxu0 0.0
  %640 = vmatprep.subr.mxu0 0.0
  %641 = vmatpush2.msra.mxu0 0.0
  %642 = vmatprep.subr.mxu0 0.0
  %643 = vmatpush2.msra.mxu0 0.0
  %644 = vmatprep.subr.mxu0 0.0
  %645 = vmatpush2.msra.mxu0 0.0
  %646 = vmatprep.mubr.f32.mxu0 0.0
  %647 = vmatmul.mubr.f32.gmra.mxu0 %v560
  %v648 = vpop.f32.mrf.mxu0
  %v649 = vadd.f32 %v581, %v648
  %v650 = vpop.f32.mrf.mxu0
  %651 = vdwg.mxu0
  %652 = vst [vmem:[%s5] sm:$0xff] %v649
  // Predicated region
  $region22: #{mlp_forward.1} parent=0 // pred_check
    _
  $region23: #{mlp_forward.1} parent=0 // pred_check_branch
    %654 = sbr.rel (0) target = $region25
  $region24: #{mlp_forward.1} parent=0 // pred_region
    _
  $region25: #{mlp_forward.1} parent=0 // pred_fallthru
    _
  // Predicated region
  $region26: #{mlp_forward.1} parent=0 // pred_check
    _
  $region27: #{mlp_forward.1} parent=0 // pred_check_branch
    %656 = sbr.rel (0) target = $region29
  $region28: #{mlp_forward.1} parent=0 // pred_region
    _
  $region29: #{mlp_forward.1} parent=0 // pred_fallthru
    _

</llo_original>
